<compile_context>
chip_gen: v5e
topology: v5e:2x2
jax: 0.10.0
libtpu: 0.0.40
codegen_flags: <defaults>
</compile_context>

<pallas_src>
import functools

import numpy as np

import jax
import jax.numpy as jnp
from jax.experimental import pallas as pl
from jax.experimental.pallas import tpu as pltpu

F_PAD = 128   # lane-dense padded feature width (one vreg of lanes)


def _round_up(v, m):
    return ((v + m - 1) // m) * m


def _pick_tile(n_pad, candidates, prefer_split=False):
    """Largest candidate tile dividing n_pad; optionally prefer >= 2 tiles."""
    if prefer_split:
        for t in candidates:
            if 2 * t <= n_pad and n_pad % t == 0:
                return t
    for t in candidates:
        if t <= n_pad and n_pad % t == 0:
            return t
    return n_pad


def _vmem_limit_bytes():
    """Generation-aware scoped-VMEM limit: capacity minus scheduling headroom."""
    try:
        cap = int(pltpu.get_tpu_info().vmem_capacity_bytes)
    except Exception:
        cap = 64 * 1024 * 1024
    limit = max(cap - 24 * 1024 * 1024, cap // 2)
    return int(min(max(limit, 32 * 1024 * 1024), 112 * 1024 * 1024))


# ---------------------------- SAGEConv layer kernel --------------------------


def _sage_layer_kernel(cols_ref, cnt_ref, *refs, tm, tk, max_k, x_resident,
                       apply_relu):
    """out[i] = relu?((1/deg * (A_counts @ X))[i] @ Wl + X[i] @ Wr + b)."""
    if x_resident:
        (a_ref, x_ref, invdeg_ref, valid_ref,
         wl_ref, wr_ref, b_ref, o_ref, acc_ref) = refs
    else:
        (a_ref, xk_ref, xi_ref, invdeg_ref, valid_ref,
         wl_ref, wr_ref, b_ref, o_ref, acc_ref) = refs

    i = pl.program_id(0)
    k = pl.program_id(1)
    nk = pl.num_programs(1)

    @pl.when(k == 0)
    def _init():
        acc_ref[...] = jnp.zeros_like(acc_ref)

    # Block-CSR: only nonzero adjacency blocks of row-tile i are visited.
    # Padded slots (k >= cnt[i]) re-point at the previous block (revisited ->
    # no new DMA) and are skipped here.
    @pl.when(k < cnt_ref[i])
    def _accumulate():
        a_blk = a_ref[...].astype(jnp.bfloat16)        # int8 edge counts
        if x_resident:
            col0 = pl.multiple_of(cols_ref[i * max_k + k] * tk, tk)
            x_blk = x_ref[pl.ds(col0, tk), :]          # (tk, F_PAD) bf16
        else:
            x_blk = xk_ref[...]
        acc_ref[...] += jnp.dot(a_blk, x_blk,
                                preferred_element_type=jnp.float32)

    @pl.when(k == nk - 1)
    def _epilogue():
        if x_resident:
            row0 = pl.multiple_of(i * tm, tm)
            x_i = x_ref[pl.ds(row0, tm), :]            # (tm, F_PAD) bf16
        else:
            x_i = xi_ref[...]
        # Mean aggregation: exact integer counts accumulated in f32, scaled by
        # the f32 1/deg here (no bf16 rounding of 1/deg).
        agg = (acc_ref[...] * invdeg_ref[...]).astype(jnp.bfloat16)
        out = (jnp.dot(agg, wl_ref[...], preferred_element_type=jnp.float32)
               + jnp.dot(x_i, wr_ref[...], preferred_element_type=jnp.float32)
               + b_ref[...])
        if apply_relu:
            out = jnp.maximum(out, 0.0)
        out = out * valid_ref[...]            # zero padded rows (drop relu(b))
        o_ref[...] = out.astype(o_ref.dtype)  # lane-dense full-width store


def sage_conv(h, a_i8, cols, cnt, inv_deg, valid, wl, wr, b, *, tm, tk, max_k,
              apply_relu, x_resident, vmem_limit):
    n_pad = h.shape[0]
    n_i = n_pad // tm

    kernel = functools.partial(_sage_layer_kernel, tm=tm, tk=tk, max_k=max_k,
                               x_resident=x_resident, apply_relu=apply_relu)

    def a_map(i, k, cols_ref, cnt_ref):
        return (i, cols_ref[i * max_k + k])

    in_specs = [pl.BlockSpec((tm, tk), a_map)]
    args = [a_i8]
    if x_resident:
        # X fully VMEM-resident across the whole grid (one HBM read per layer).
        # TODO(synk): pipeline_mode=pl.Buffered(1) would halve its VMEM cost.
        in_specs.append(pl.BlockSpec((n_pad, F_PAD),
                                     lambda i, k, cols_ref, cnt_ref: (0, 0)))
        args.append(h)
    else:
        # Streamed X: one blocked view per nonzero A block column (A@X term),
        # one per row tile (the Wr / epilogue term).
        def xk_map(i, k, cols_ref, cnt_ref):
            return (cols_ref[i * max_k + k], 0)
        in_specs.append(pl.BlockSpec((tk, F_PAD), xk_map))
        in_specs.append(pl.BlockSpec((tm, F_PAD),
                                     lambda i, k, cols_ref, cnt_ref: (i, 0)))
        args.extend([h, h])
    in_specs.extend([
        pl.BlockSpec((tm, 1), lambda i, k, cols_ref, cnt_ref: (i, 0)),      # 1/deg
        pl.BlockSpec((tm, 1), lambda i, k, cols_ref, cnt_ref: (i, 0)),      # valid
        pl.BlockSpec((F_PAD, F_PAD), lambda i, k, cols_ref, cnt_ref: (0, 0)),  # Wl
        pl.BlockSpec((F_PAD, F_PAD), lambda i, k, cols_ref, cnt_ref: (0, 0)),  # Wr
        pl.BlockSpec((1, F_PAD), lambda i, k, cols_ref, cnt_ref: (0, 0)),      # b
    ])
    args.extend([inv_deg, valid, wl, wr, b])

    flops = 2 * n_i * max_k * tm * tk * F_PAD + 4 * n_pad * F_PAD * F_PAD
    bytes_accessed = int(n_i * max_k * tm * tk           # int8 A blocks
                         + 2 * n_pad * F_PAD * 2         # X in + out (bf16)
                         + 4 * F_PAD * F_PAD             # weights (bf16)
                         + 2 * n_pad * 4)                # 1/deg + valid (f32)

    return pl.pallas_call(
        kernel,
        out_shape=jax.ShapeDtypeStruct((n_pad, F_PAD), jnp.bfloat16),
        grid_spec=pltpu.PrefetchScalarGridSpec(
            num_scalar_prefetch=2,
            grid=(n_i, max_k),
            in_specs=in_specs,
            out_specs=pl.BlockSpec((tm, F_PAD),
                                   lambda i, k, cols_ref, cnt_ref: (i, 0)),
            scratch_shapes=[pltpu.VMEM((tm, F_PAD), jnp.float32)],
        ),
        compiler_params=pltpu.CompilerParams(
            dimension_semantics=("parallel", "arbitrary"),
            vmem_limit_bytes=vmem_limit,
        ),
        cost_estimate=pl.CostEstimate(flops=flops, transcendentals=0,
                                      bytes_accessed=bytes_accessed),
    )(cols, cnt, *args)


# ------------------------------ pooling kernel -------------------------------


def _pool_kernel(p_ref, h_ref, o_ref):
    """Indicator-matrix pooling: hg_sum = P_ind @ H (bf16 MXU, f32 accumulate)."""

    @pl.when(pl.program_id(0) == 0)
    def _init():
        o_ref[...] = jnp.zeros_like(o_ref)

    o_ref[...] += jnp.dot(p_ref[...], h_ref[...],
                          preferred_element_type=jnp.float32)


def global_sum_pool_pallas(p_ind, h, *, tk, vmem_limit):
    g_pad, n_pad = p_ind.shape
    n_k = n_pad // tk
    return pl.pallas_call(
        _pool_kernel,
        out_shape=jax.ShapeDtypeStruct((g_pad, F_PAD), jnp.float32),
        grid_spec=pltpu.PrefetchScalarGridSpec(
            num_scalar_prefetch=0,
            grid=(n_k,),
            in_specs=[
                pl.BlockSpec((g_pad, tk), lambda k: (0, k)),
                pl.BlockSpec((tk, F_PAD), lambda k: (k, 0)),
            ],
            out_specs=pl.BlockSpec((g_pad, F_PAD), lambda k: (0, 0)),
        ),
        compiler_params=pltpu.CompilerParams(
            dimension_semantics=("arbitrary",),
            vmem_limit_bytes=vmem_limit,
        ),
    )(p_ind, h)


# ------------------------------ plain-JAX glue -------------------------------


def build_adjacency(edge_index, num_nodes, n_pad):
    """Dense int8 edge-count adjacency + f32 1/in-degree (mean aggregation)."""
    src, dst = edge_index[0], edge_index[1]
    counts = jnp.zeros((n_pad, n_pad), jnp.int32).at[dst, src].add(1)
    deg = counts.sum(axis=1, keepdims=True).astype(jnp.float32)
    inv_deg = 1.0 / jnp.maximum(deg, 1.0)
    # TODO(synk): >127 parallel edges between a single node pair saturate int8.
    a_i8 = jnp.clip(counts, 0, 127).astype(jnp.int8)
    return a_i8, inv_deg


def build_block_csr(a_i8, tm, tk):
    """Per-row-tile lists of nonzero adjacency block columns (host side)."""
    n_pad = a_i8.shape[0]
    n_i, n_k = n_pad // tm, n_pad // tk
    blk_nz = (a_i8.reshape(n_i, tm, n_k, tk) != 0).any(axis=(1, 3))
    blk_nz = np.asarray(jax.device_get(blk_nz))
    cnt = blk_nz.sum(axis=1).astype(np.int32)
    max_k = max(int(cnt.max()), 1)
    cols = np.zeros((n_i, max_k), np.int32)
    for i in range(n_i):
        idx = np.flatnonzero(blk_nz[i])
        if idx.size:
            cols[i, :idx.size] = idx
            cols[i, idx.size:] = idx[-1]   # repeat -> revisited block, no DMA
    return jnp.asarray(cols.reshape(-1)), jnp.asarray(cnt), max_k


def _pad_layer_params(wl, wr, b):
    f_in, f_out = wl.shape
    wl_p = jnp.zeros((F_PAD, F_PAD), jnp.float32).at[:f_in, :f_out].set(wl)
    wr_p = jnp.zeros((F_PAD, F_PAD), jnp.float32).at[:f_in, :f_out].set(wr)
    b_p = jnp.zeros((1, F_PAD), jnp.float32).at[0, :f_out].set(b.reshape(-1))
    return wl_p.astype(jnp.bfloat16), wr_p.astype(jnp.bfloat16), b_p


def gcn_forward(x, edge_index, batch, params, num_graphs):
    n, f_in = x.shape
    n_pad = _round_up(n, 128)
    # Large tiles amortize the ~0.35us/grid-step overhead; tm prefers a >=2-way
    # split so the 'parallel' row axis can shard across v7x's 2 TensorCores.
    tm = _pick_tile(n_pad, (512, 256, 128), prefer_split=True)
    tk = _pick_tile(n_pad, (2048, 1024, 512, 256, 128))
    vmem_limit = _vmem_limit_bytes()

    a_i8, inv_deg = build_adjacency(edge_index, n, n_pad)
    cols, cnt, max_k = build_block_csr(a_i8, tm, tk)
    valid = (jnp.arange(n_pad) < n).astype(jnp.float32).reshape(n_pad, 1)

    # Keep X VMEM-resident unless it (plus A tiles / weights / accumulator)
    # would blow the per-core VMEM budget; otherwise stream X per block.
    resident_bytes = (2 * n_pad * F_PAD * 2      # double-buffered bf16 X
                      + 2 * tm * tk              # double-buffered int8 A tile
                      + tm * F_PAD * 4           # f32 accumulator
                      + 6 * F_PAD * F_PAD)       # weights / bias
    x_resident = resident_bytes <= vmem_limit // 2

    h = jnp.zeros((n_pad, F_PAD), jnp.bfloat16)
    h = h.at[:n, :f_in].set(x.astype(jnp.bfloat16))

    num_layers = len(params)
    for li, (wl, wr, b) in enumerate(params):
        wl_p, wr_p, b_p = _pad_layer_params(wl, wr, b)
        h = sage_conv(h, a_i8, cols, cnt, inv_deg, valid, wl_p, wr_p, b_p,
                      tm=tm, tk=tk, max_k=max_k,
                      apply_relu=(li < num_layers - 1),
                      x_resident=x_resident, vmem_limit=vmem_limit)

    # global_mean_pool: bf16 0/1 indicator matmul in Pallas, f32 1/count scale.
    g_pad = _round_up(max(num_graphs, 1), 16)
    p_ind = jnp.zeros((g_pad, n_pad), jnp.float32)
    p_ind = p_ind.at[batch, jnp.arange(n)].set(1.0)
    counts = p_ind.sum(axis=1, keepdims=True)
    hg = global_sum_pool_pallas(p_ind.astype(jnp.bfloat16), h, tk=tk,
                                vmem_limit=vmem_limit)
    hg = hg / jnp.maximum(counts, 1.0)

    f_out = params[-1][0].shape[1]
    return jnp.squeeze(hg[:num_graphs, :f_out])


def _reference(x, edge_index, batch, params, num_graphs):
    """Pure-JAX f32 reference with identical semantics (for a sanity check)."""
    n = x.shape[0]
    a = jnp.zeros((n, n), jnp.float32).at[edge_index[1], edge_index[0]].add(1.0)
    a = a / jnp.maximum(a.sum(axis=1, keepdims=True), 1.0)
    h = x
    for li, (wl, wr, b) in enumerate(params):
        h = (a @ h) @ wl + h @ wr + b
        if li < len(params) - 1:
            h = jnp.maximum(h, 0.0)
    p = jnp.zeros((num_graphs, n), jnp.float32)
    p = p.at[batch, jnp.arange(n)].set(1.0)
    p = p / jnp.maximum(p.sum(axis=1, keepdims=True), 1.0)
    return jnp.squeeze(p @ h)


if __name__ == "__main__":
    # Small, deterministic synthetic graph batch (2 graphs, 16 nodes total).
    N, E, G = 16, 48, 2
    F_IN, F_HID, F_OUT = 8, 16, 8

    key = jax.random.PRNGKey(0)
    keys = jax.random.split(key, 16)

    x = jax.random.normal(keys[0], (N, F_IN), dtype=jnp.float32)
    src = jax.random.randint(keys[1], (E,), 0, N)
    dst = jax.random.randint(keys[2], (E,), 0, N)
    edge_index = jnp.stack([src, dst]).astype(jnp.int32)
    batch = jnp.concatenate(
        [jnp.zeros(N // 2, jnp.int32), jnp.ones(N - N // 2, jnp.int32)]
    )

    # SAGEConv params: lin_l (wl, with bias), lin_r (wr, no bias),
    # stored as [F_in, F_out] for right-multiplication.
    layer_dims = [(F_IN, F_HID), (F_HID, F_HID), (F_HID, F_HID), (F_HID, F_OUT)]
    params = []
    ki = 3
    for fi, fo in layer_dims:
        scale = 1.0 / jnp.sqrt(jnp.float32(fi))
        wl = jax.random.normal(keys[ki], (fi, fo), jnp.float32) * scale
        wr = jax.random.normal(keys[ki + 1], (fi, fo), jnp.float32) * scale
        b = jax.random.normal(keys[ki + 2], (1, fo), jnp.float32) * 0.01
        params.append((wl, wr, b))
        ki += 3

    out = gcn_forward(x, edge_index, batch, params, num_graphs=G)
    out = jax.block_until_ready(out)
    assert out.shape == (G, F_OUT), out.shape

    # Loose tolerance: X/W and inter-layer activations run in bf16 with f32
    # accumulation (adjacency counts and 1/deg scaling are exact in f32).
    ref = _reference(x, edge_index, batch, params, num_graphs=G)
    assert bool(jnp.allclose(out.astype(jnp.float32), ref, atol=1e-1, rtol=1e-1))

    print("KERNEL_OK")
</pallas_src>

<mosaic_0001>
module attributes {stable_mosaic.version = 11 : i64} {
  func.func @_sage_layer_kernel(%arg0: i32, %arg1: i32, %arg2: memref<1xi32, #tpu.memory_space<smem>>, %arg3: memref<1xi32, #tpu.memory_space<smem>>, %arg4: memref<128x128xi8, #tpu.memory_space<vmem>>, %arg5: memref<128x128xbf16, #tpu.memory_space<vmem>>, %arg6: memref<128x1xf32, #tpu.memory_space<vmem>>, %arg7: memref<128x1xf32, #tpu.memory_space<vmem>>, %arg8: memref<128x128xbf16, #tpu.memory_space<vmem>>, %arg9: memref<128x128xbf16, #tpu.memory_space<vmem>>, %arg10: memref<1x128xf32, #tpu.memory_space<vmem>>, %arg11: memref<128x128xbf16, #tpu.memory_space<vmem>>, %arg12: memref<128x128xf32, #tpu.memory_space<vmem>>) attributes {dimension_semantics = [#tpu.dimension_semantics<parallel>, #tpu.dimension_semantics<arbitrary>], iteration_bounds = array<i64: 1, 1>, scalar_prefetch = 2 : i64, scratch_operands = 1 : i64, tpu.core_type = #tpu.core_type<tc>, window_params = [{transform_indices = @transform_0, window_bounds = array<i64: 128, 128>}, {pipeline_mode = #tpu.pipeline_mode<synchronous>, transform_indices = @transform_1, window_bounds = array<i64: 128, 128>}, {transform_indices = @transform_2, window_bounds = array<i64: 128, 1>}, {transform_indices = @transform_3, window_bounds = array<i64: 128, 1>}, {pipeline_mode = #tpu.pipeline_mode<synchronous>, transform_indices = @transform_4, window_bounds = array<i64: 128, 128>}, {pipeline_mode = #tpu.pipeline_mode<synchronous>, transform_indices = @transform_5, window_bounds = array<i64: 128, 128>}, {pipeline_mode = #tpu.pipeline_mode<synchronous>, transform_indices = @transform_6, window_bounds = array<i64: 1, 128>}, {transform_indices = @transform_7, window_bounds = array<i64: 128, 128>}]} {
    %c0_i32 = arith.constant 0 : i32
    %0 = arith.cmpi eq, %arg1, %c0_i32 : i32
    %1 = arith.extui %0 : i1 to i32
    %c0_i32_0 = arith.constant 0 : i32
    %2 = arith.cmpi ne, %1, %c0_i32_0 : i32
    scf.if %2 {
      %cst = arith.constant 0.000000e+00 : f32
      %11 = vector.broadcast %cst : f32 to vector<128x128xf32>
      %c0 = arith.constant 0 : index
      %c0_4 = arith.constant 0 : index
      %12 = vector.load %arg12[%c0, %c0_4] : memref<128x128xf32, #tpu.memory_space<vmem>>, vector<128x128xf32>
      tpu.vector_store %arg12[%c0, %c0_4], %11 {strides = array<i32>} : memref<128x128xf32, #tpu.memory_space<vmem>>, vector<128x128xf32>,
    } else {
    }
    %3 = arith.index_cast %arg0 : i32 to index
    %4 = memref.load %arg3[%3] : memref<1xi32, #tpu.memory_space<smem>>
    %5 = arith.cmpi slt, %arg1, %4 : i32
    %6 = arith.extui %5 : i1 to i32
    %c0_i32_1 = arith.constant 0 : i32
    %7 = arith.cmpi ne, %6, %c0_i32_1 : i32
    scf.if %7 {
      %c0 = arith.constant 0 : index
      %c0_4 = arith.constant 0 : index
      %11 = vector.load %arg4[%c0, %c0_4] : memref<128x128xi8, #tpu.memory_space<vmem>>, vector<128x128xi8>
      %12 = arith.sitofp %11 : vector<128x128xi8> to vector<128x128xbf16>
      %c1_i32 = arith.constant 1 : i32
      %13 = arith.muli %arg0, %c1_i32 : i32
      %14 = arith.addi %13, %arg1 : i32
      %15 = arith.index_cast %14 : i32 to index
      %16 = memref.load %arg2[%15] : memref<1xi32, #tpu.memory_space<smem>>
      %c128_i32 = arith.constant 128 : i32
      %17 = arith.muli %16, %c128_i32 : i32
      %18 = tpu.assume_multiple %17, 128 : i32
      %19 = arith.index_cast %18 : i32 to index
      %c0_5 = arith.constant 0 : index
      %20 = vector.load %arg5[%19, %c0_5] : memref<128x128xbf16, #tpu.memory_space<vmem>>, vector<128x128xbf16>
      %c0_6 = arith.constant 0 : index
      %c0_7 = arith.constant 0 : index
      %21 = vector.load %arg12[%c0_6, %c0_7] : memref<128x128xf32, #tpu.memory_space<vmem>>, vector<128x128xf32>
      %cst = arith.constant dense<0.000000e+00> : vector<128x128xf32>
      %22 = tpu.matmul %12, %20, %cst {dimension_numbers = #tpu.dot_dimension_numbers<[1], [0], [0], [1], [0, 0, 1, 1], [], []>} : vector<128x128xbf16>, vector<128x128xbf16>, vector<128x128xf32> -> vector<128x128xf32>
      %23 = arith.addf %21, %22 : vector<128x128xf32>
      %c0_8 = arith.constant 0 : index
      %c0_9 = arith.constant 0 : index
      %24 = vector.load %arg12[%c0_8, %c0_9] : memref<128x128xf32, #tpu.memory_space<vmem>>, vector<128x128xf32>
      tpu.vector_store %arg12[%c0_8, %c0_9], %23 {strides = array<i32>} : memref<128x128xf32, #tpu.memory_space<vmem>>, vector<128x128xf32>,
    } else {
    }
    %c0_i32_2 = arith.constant 0 : i32
    %8 = arith.cmpi eq, %arg1, %c0_i32_2 : i32
    %9 = arith.extui %8 : i1 to i32
    %c0_i32_3 = arith.constant 0 : i32
    %10 = arith.cmpi ne, %9, %c0_i32_3 : i32
    scf.if %10 {
      %c128_i32 = arith.constant 128 : i32
      %11 = arith.muli %arg0, %c128_i32 : i32
      %12 = tpu.assume_multiple %11, 128 : i32
      %13 = arith.index_cast %12 : i32 to index
      %c0 = arith.constant 0 : index
      %14 = vector.load %arg5[%13, %c0] : memref<128x128xbf16, #tpu.memory_space<vmem>>, vector<128x128xbf16>
      %c0_4 = arith.constant 0 : index
      %c0_5 = arith.constant 0 : index
      %15 = vector.load %arg12[%c0_4, %c0_5] : memref<128x128xf32, #tpu.memory_space<vmem>>, vector<128x128xf32>
      %c0_6 = arith.constant 0 : index
      %c0_7 = arith.constant 0 : index
      %16 = vector.load %arg6[%c0_6, %c0_7] : memref<128x1xf32, #tpu.memory_space<vmem>>, vector<128x1xf32>
      %17 = vector.broadcast %16 : vector<128x1xf32> to vector<128x128xf32>
      %18 = arith.mulf %15, %17 : vector<128x128xf32>
      %19 = arith.truncf %18 : vector<128x128xf32> to vector<128x128xbf16>
      %c0_8 = arith.constant 0 : index
      %c0_9 = arith.constant 0 : index
      %20 = vector.load %arg8[%c0_8, %c0_9] : memref<128x128xbf16, #tpu.memory_space<vmem>>, vector<128x128xbf16>
      %cst = arith.constant dense<0.000000e+00> : vector<128x128xf32>
      %21 = tpu.matmul %19, %20, %cst {dimension_numbers = #tpu.dot_dimension_numbers<[1], [0], [0], [1], [0, 0, 1, 1], [], []>} : vector<128x128xbf16>, vector<128x128xbf16>, vector<128x128xf32> -> vector<128x128xf32>
      %c0_10 = arith.constant 0 : index
      %c0_11 = arith.constant 0 : index
      %22 = vector.load %arg9[%c0_10, %c0_11] : memref<128x128xbf16, #tpu.memory_space<vmem>>, vector<128x128xbf16>
      %cst_12 = arith.constant dense<0.000000e+00> : vector<128x128xf32>
      %23 = tpu.matmul %14, %22, %cst_12 {dimension_numbers = #tpu.dot_dimension_numbers<[1], [0], [0], [1], [0, 0, 1, 1], [], []>} : vector<128x128xbf16>, vector<128x128xbf16>, vector<128x128xf32> -> vector<128x128xf32>
      %24 = arith.addf %21, %23 : vector<128x128xf32>
      %c0_13 = arith.constant 0 : index
      %c0_14 = arith.constant 0 : index
      %25 = vector.load %arg10[%c0_13, %c0_14] : memref<1x128xf32, #tpu.memory_space<vmem>>, vector<1x128xf32>
      %26 = vector.broadcast %25 : vector<1x128xf32> to vector<128x128xf32>
      %27 = arith.addf %24, %26 : vector<128x128xf32>
      %cst_15 = arith.constant 0.000000e+00 : f32
      %28 = vector.broadcast %cst_15 : f32 to vector<128x128xf32>
      %29 = arith.maximumf %27, %28 : vector<128x128xf32>
      %c0_16 = arith.constant 0 : index
      %c0_17 = arith.constant 0 : index
      %30 = vector.load %arg7[%c0_16, %c0_17] : memref<128x1xf32, #tpu.memory_space<vmem>>, vector<128x1xf32>
      %31 = vector.broadcast %30 : vector<128x1xf32> to vector<128x128xf32>
      %32 = arith.mulf %29, %31 : vector<128x128xf32>
      %33 = arith.truncf %32 : vector<128x128xf32> to vector<128x128xbf16>
      %c0_18 = arith.constant 0 : index
      %c0_19 = arith.constant 0 : index
      %34 = vector.load %arg11[%c0_18, %c0_19] : memref<128x128xbf16, #tpu.memory_space<vmem>>, vector<128x128xbf16>
      tpu.vector_store %arg11[%c0_18, %c0_19], %33 {strides = array<i32>} : memref<128x128xbf16, #tpu.memory_space<vmem>>, vector<128x128xbf16>,
    } else {
    }
    return
  }
  func.func @transform_0(%arg0: i32, %arg1: i32, %arg2: memref<1xi32, #tpu.memory_space<smem>>, %arg3: memref<1xi32, #tpu.memory_space<smem>>) -> (i32, i32) {
    %c1_i32 = arith.constant 1 : i32
    %0 = arith.muli %arg0, %c1_i32 : i32
    %1 = arith.addi %0, %arg1 : i32
    %2 = arith.index_cast %1 : i32 to index
    %3 = memref.load %arg2[%2] : memref<1xi32, #tpu.memory_space<smem>>
    %c0_i32 = arith.constant 0 : i32
    return %arg0, %3 : i32, i32
  }
  func.func @transform_1(%arg0: i32, %arg1: i32, %arg2: memref<1xi32, #tpu.memory_space<smem>>, %arg3: memref<1xi32, #tpu.memory_space<smem>>) -> (i32, i32) {
    %c0_i32 = arith.constant 0 : i32
    %c0_i32_0 = arith.constant 0 : i32
    %c0_i32_1 = arith.constant 0 : i32
    return %c0_i32, %c0_i32_0 : i32, i32
  }
  func.func @transform_2(%arg0: i32, %arg1: i32, %arg2: memref<1xi32, #tpu.memory_space<smem>>, %arg3: memref<1xi32, #tpu.memory_space<smem>>) -> (i32, i32) {
    %c0_i32 = arith.constant 0 : i32
    %c0_i32_0 = arith.constant 0 : i32
    return %arg0, %c0_i32 : i32, i32
  }
  func.func @transform_3(%arg0: i32, %arg1: i32, %arg2: memref<1xi32, #tpu.memory_space<smem>>, %arg3: memref<1xi32, #tpu.memory_space<smem>>) -> (i32, i32) {
    %c0_i32 = arith.constant 0 : i32
    %c0_i32_0 = arith.constant 0 : i32
    return %arg0, %c0_i32 : i32, i32
  }
  func.func @transform_4(%arg0: i32, %arg1: i32, %arg2: memref<1xi32, #tpu.memory_space<smem>>, %arg3: memref<1xi32, #tpu.memory_space<smem>>) -> (i32, i32) {
    %c0_i32 = arith.constant 0 : i32
    %c0_i32_0 = arith.constant 0 : i32
    %c0_i32_1 = arith.constant 0 : i32
    return %c0_i32, %c0_i32_0 : i32, i32
  }
  func.func @transform_5(%arg0: i32, %arg1: i32, %arg2: memref<1xi32, #tpu.memory_space<smem>>, %arg3: memref<1xi32, #tpu.memory_space<smem>>) -> (i32, i32) {
    %c0_i32 = arith.constant 0 : i32
    %c0_i32_0 = arith.constant 0 : i32
    %c0_i32_1 = arith.constant 0 : i32
    return %c0_i32, %c0_i32_0 : i32, i32
  }
  func.func @transform_6(%arg0: i32, %arg1: i32, %arg2: memref<1xi32, #tpu.memory_space<smem>>, %arg3: memref<1xi32, #tpu.memory_space<smem>>) -> (i32, i32) {
    %c0_i32 = arith.constant 0 : i32
    %c0_i32_0 = arith.constant 0 : i32
    %c0_i32_1 = arith.constant 0 : i32
    return %c0_i32, %c0_i32_0 : i32, i32
  }
  func.func @transform_7(%arg0: i32, %arg1: i32, %arg2: memref<1xi32, #tpu.memory_space<smem>>, %arg3: memref<1xi32, #tpu.memory_space<smem>>) -> (i32, i32) {
    %c0_i32 = arith.constant 0 : i32
    %c0_i32_0 = arith.constant 0 : i32
    return %arg0, %c0_i32 : i32, i32
  }
}

</mosaic_0001>

<llo_original>
// kernel: tpu_custom_call.1
$region0: #{tpu_custom_call.1}
  #allocation0 [shape = 'u32[]', space=smem, size = 0x4, offset = 0x4, fixed_abs, tag = 'smem constant byte address 0x4 - core index']
  #allocation1 [shape = 'u32[72,128]{1,0:T(1,128)}', space=vmem, size = 0x9000, scoped, tag = 'internal scratch']
  #allocation2 [shape = 'f32[128,128]{1,0:T(8,128)}', space=vmem, size = 0x10000, scoped, tag = 'scratch operand']
  #allocation3 [shape = 's32[1]{0}', space=sflag, size = 0x4, scoped, tag = 'scoped memory for tpu_custom_call.1']
  #allocation4 [shape = 's32[1]{0:T(128)S(6)}', space=smem, size = 0x200, scoped, tag = 'prefetched SMEM operand 0']
  #allocation5 [shape = 's32[1]{0:T(128)S(6)}', space=smem, size = 0x200, scoped, tag = 'prefetched SMEM operand 1']
  %s0 = inlined_call_operand.<no memory space> [shape: s32[1], index: 0, kind: input, shape index: {}]
  %s1 = inlined_call_operand.<no memory space> [shape: s32[1], index: 1, kind: input, shape index: {}]
  %s2 = inlined_call_operand.vmem [shape: s8[128,128], index: 2, kind: input, shape index: {}]
  %s3 = inlined_call_operand.vmem [shape: bf16[128,128], index: 3, kind: input, shape index: {}]
  %s4 = inlined_call_operand.vmem [shape: f32[128,1], index: 4, kind: input, shape index: {}]
  %s5 = inlined_call_operand.vmem [shape: f32[128,1], index: 5, kind: input, shape index: {}]
  %s6 = inlined_call_operand.vmem [shape: bf16[128,128], index: 6, kind: input, shape index: {}]
  %s7 = inlined_call_operand.vmem [shape: bf16[128,128], index: 7, kind: input, shape index: {}]
  %s8 = inlined_call_operand.vmem [shape: f32[1,128], index: 8, kind: input, shape index: {}]
  %s9 = inlined_call_operand.hbm [shape: bf16[128,128], index: 9, kind: output, shape index: {}]
  %s10 = sld [smem:[#allocation0]]
  $region50: #{tpu_custom_call.1} parent=0
    _
  %s12 = ssub.s32 1, %s10
  %s13 = scalar_select 0, %s12, %s10
  %14 = sst [smem:[#allocation4]] %s0
  %15 = sst [smem:[#allocation5]] %s1
  $region1: #{tpu_custom_call.1} parent=0
    #allocation6 [shape = 'u8[32768]{0}', space=vmem, size = 0x8000, scoped, tag = 'output window, operand 0, single buffered']
    #allocation7 [shape = 's32[1]{0}', space=sflag, size = 0x4, scoped, tag = 'scoped memory for tpu_custom_call.1']
    %16 = vsyncpa [#allocation7], 0
    // Predicated region
    $region2: #{tpu_custom_call.1} parent=1 // pred_check
      _
    $region3: #{tpu_custom_call.1} parent=1 // pred_check_branch
      %18 = sbr.rel (0) target = $region5
    $region4: #{tpu_custom_call.1} parent=1 // pred_region
      %s19 = sadd.s32 0, 0
      %s20 = sld [smem:[#allocation4 + %s19]]
      %p21 = scmp.lt.s32.totalorder %s20, 0
      %s22 = scalar_select %p21, %s20, 0
      %s23 = smul.addr %s22, 8
      %s24 = scalar_lea.vmem %s2, %s23
      %s25 = sadd.s32 0, 0
      %s26 = sld [smem:[#allocation4 + %s25]]
    $region5: #{tpu_custom_call.1} parent=1 // pred_fallthru
      _
    // Predicated region
    $region6: #{tpu_custom_call.1} parent=1 // pred_check
      _
    $region7: #{tpu_custom_call.1} parent=1 // pred_check_branch
      %28 = sbr.rel (0) target = $region9
    $region8: #{tpu_custom_call.1} parent=1 // pred_region
      _
    $region9: #{tpu_custom_call.1} parent=1 // pred_fallthru
      _
    // Predicated region
    $region10: #{tpu_custom_call.1} parent=1 // pred_check
      _
    $region11: #{tpu_custom_call.1} parent=1 // pred_check_branch
      %30 = sbr.rel (0) target = $region13
    $region12: #{tpu_custom_call.1} parent=1 // pred_region
      _
    $region13: #{tpu_custom_call.1} parent=1 // pred_fallthru
      _
    // Predicated region
    $region14: #{tpu_custom_call.1} parent=1 // pred_check
      _
    $region15: #{tpu_custom_call.1} parent=1 // pred_check_branch
      %32 = sbr.rel (0) target = $region17
    $region16: #{tpu_custom_call.1} parent=1 // pred_region
      _
    $region17: #{tpu_custom_call.1} parent=1 // pred_fallthru
      _
    // Predicated region
    $region18: #{tpu_custom_call.1} parent=1 // pred_check
      _
    $region19: #{tpu_custom_call.1} parent=1 // pred_check_branch
      %34 = sbr.rel (0) target = $region21
    $region20: #{tpu_custom_call.1} parent=1 // pred_region
      _
    $region21: #{tpu_custom_call.1} parent=1 // pred_fallthru
      _
    // Predicated region
    $region22: #{tpu_custom_call.1} parent=1 // pred_check
      _
    $region23: #{tpu_custom_call.1} parent=1 // pred_check_branch
      %36 = sbr.rel (0) target = $region25
    $region24: #{tpu_custom_call.1} parent=1 // pred_region
      _
    $region25: #{tpu_custom_call.1} parent=1 // pred_fallthru
      _
    // Predicated region
    $region26: #{tpu_custom_call.1} parent=1 // pred_check
      _
    $region27: #{tpu_custom_call.1} parent=1 // pred_check_branch
      %38 = sbr.rel (0) target = $region29
    $region28: #{tpu_custom_call.1} parent=1 // pred_region
      _
    $region29: #{tpu_custom_call.1} parent=1 // pred_fallthru
      _
    %s39 = sadd.s32 0, 0
    %s40 = sld [smem:[#allocation4 + %s39]]
    %p41 = scmp.lt.s32.totalorder %s40, 0
    %s42 = scalar_select %p41, %s40, 0
    %s43 = smul.addr %s42, 8
    %s44 = scalar_lea.vmem %s2, %s43
    %s45 = sadd.s32 0, 0
    %s46 = sld [smem:[#allocation4 + %s45]]
    %p47 = scmp.lt.s32.totalorder %s46, 0
    %s48 = scalar_select %p47, %s46, 0
    %s49 = smul.addr %s48, 8
    %s50 = scalar_lea.vmem %s2, %s49
    %s51 = sadd.s32 0, 0
    %s52 = sld [smem:[#allocation4 + %s51]]
    %p53 = scmp.eq.s32.totalorder 0, 0
    // Predicated region
    $region30: #{tpu_custom_call.1} parent=1 // pred_check
      %p54 = pneg %p53
    $region31: #{tpu_custom_call.1} parent=1 // pred_check_branch
      %56 = sbr.rel (%p54) target = $region33
    $region32: #{tpu_custom_call.1} parent=1 // pred_region
      %57 = vst [vmem:[#allocation2] sm:$0xff] 0.0
      %58 = vst [vmem:[#allocation2 + $0x8] sm:$0xff] 0.0
      %59 = vst [vmem:[#allocation2 + $0x10] sm:$0xff] 0.0
      %60 = vst [vmem:[#allocation2 + $0x18] sm:$0xff] 0.0
      %61 = vst [vmem:[#allocation2 + $0x20] sm:$0xff] 0.0
      %62 = vst [vmem:[#allocation2 + $0x28] sm:$0xff] 0.0
      %63 = vst [vmem:[#allocation2 + $0x30] sm:$0xff] 0.0
      %64 = vst [vmem:[#allocation2 + $0x38] sm:$0xff] 0.0
      %65 = vst [vmem:[#allocation2 + $0x40] sm:$0xff] 0.0
      %66 = vst [vmem:[#allocation2 + $0x48] sm:$0xff] 0.0
      %67 = vst [vmem:[#allocation2 + $0x50] sm:$0xff] 0.0
      %68 = vst [vmem:[#allocation2 + $0x58] sm:$0xff] 0.0
      %69 = vst [vmem:[#allocation2 + $0x60] sm:$0xff] 0.0
      %70 = vst [vmem:[#allocation2 + $0x68] sm:$0xff] 0.0
      %71 = vst [vmem:[#allocation2 + $0x70] sm:$0xff] 0.0
      %72 = vst [vmem:[#allocation2 + $0x78] sm:$0xff] 0.0
    $region33: #{tpu_custom_call.1} parent=1 // pred_fallthru
      _
    %s73 = sld [smem:[#allocation5]]
    %p74 = scmp.lt.s32.totalorder 0, %s73
    // Predicated region
    $region34: #{tpu_custom_call.1} parent=1 // pred_check
      %p75 = pneg %p74
    $region35: #{tpu_custom_call.1} parent=1 // pred_check_branch
      %77 = sbr.rel (%p75) target = $region37
    $region36: #{tpu_custom_call.1} parent=1 // pred_region
      %v78 = vld [vmem:[%s50] sm:$0xff]
      %v79 = vld [vmem:[%s50 + $0x8] sm:$0xff]
      %v80 = vld [vmem:[%s50 + $0x10] sm:$0xff]
      %v81 = vld [vmem:[%s50 + $0x18] sm:$0xff]
      %v82 = vunpack.c.0.s8 %v78
      %v83 = vunpack.c.1.s8 %v78
      %v84 = vunpack.c.2.s8 %v78
      %v85 = vunpack.c.3.s8 %v78
      %v86 = vunpack.c.0.s8 %v79
      %v87 = vunpack.c.1.s8 %v79
      %v88 = vunpack.c.2.s8 %v79
      %v89 = vunpack.c.3.s8 %v79
      %v90 = vunpack.c.0.s8 %v80
      %v91 = vunpack.c.1.s8 %v80
      %v92 = vunpack.c.2.s8 %v80
      %v93 = vunpack.c.3.s8 %v80
      %v94 = vunpack.c.0.s8 %v81
      %v95 = vunpack.c.1.s8 %v81
      %v96 = vunpack.c.2.s8 %v81
      %v97 = vunpack.c.3.s8 %v81
      %v98 = vcvt.s32.f32 %v82
      %v99 = vcvt.s32.f32 %v83
      %v100 = vcvt.s32.f32 %v84
      %v101 = vcvt.s32.f32 %v85
      %v102 = vcvt.s32.f32 %v86
      %v103 = vcvt.s32.f32 %v87
      %v104 = vcvt.s32.f32 %v88
      %v105 = vcvt.s32.f32 %v89
      %v106 = vcvt.s32.f32 %v90
      %v107 = vcvt.s32.f32 %v91
      %v108 = vcvt.s32.f32 %v92
      %v109 = vcvt.s32.f32 %v93
      %v110 = vcvt.s32.f32 %v94
      %v111 = vcvt.s32.f32 %v95
      %v112 = vcvt.s32.f32 %v96
      %v113 = vcvt.s32.f32 %v97
      %v114 = vpack.c.bf16 %v99, %v98
      %v115 = vpack.c.bf16 %v101, %v100
      %v116 = vpack.c.bf16 %v103, %v102
      %v117 = vpack.c.bf16 %v105, %v104
      %v118 = vpack.c.bf16 %v107, %v106
      %v119 = vpack.c.bf16 %v109, %v108
      %v120 = vpack.c.bf16 %v111, %v110
      %v121 = vpack.c.bf16 %v113, %v112
      %s122 = sadd.s32 0, 0
      %s123 = sld [smem:[#allocation4 + %s122]]
      %s124 = smul.u32 %s123, 128
      %s125 = sshra.s32 %s124, 3
      %s126 = sand.u32 %s124, 7
      %s127 = smul.addr %s125, 4
      %s128 = scalar_lea.vmem %s3, %s127
      %v129 = vld [vmem:[%s128] sm:$0xf]
      %v130 = vld [vmem:[%s128 + $0x4] sm:$0xf]
      %v131 = vld [vmem:[%s128 + $0x8] sm:$0xf]
      %v132 = vld [vmem:[%s128 + $0xc] sm:$0xf]
      %v133 = vld [vmem:[%s128 + $0x10] sm:$0xf]
      %v134 = vld [vmem:[%s128 + $0x14] sm:$0xf]
      %v135 = vld [vmem:[%s128 + $0x18] sm:$0xf]
      %v136 = vld [vmem:[%s128 + $0x1c] sm:$0xf]
      %v137 = vld [vmem:[%s128 + $0x20] sm:$0xf]
      %v138 = vld [vmem:[%s128 + $0x24] sm:$0xf]
      %v139 = vld [vmem:[%s128 + $0x28] sm:$0xf]
      %v140 = vld [vmem:[%s128 + $0x2c] sm:$0xf]
      %v141 = vld [vmem:[%s128 + $0x30] sm:$0xf]
      %v142 = vld [vmem:[%s128 + $0x34] sm:$0xf]
      %v143 = vld [vmem:[%s128 + $0x38] sm:$0xf]
      %v144 = vld [vmem:[%s128 + $0x3c] sm:$0xf]
      %v145 = vld [vmem:[#allocation2] sm:$0xff]
      %v146 = vld [vmem:[#allocation2 + $0x8] sm:$0xff]
      %v147 = vld [vmem:[#allocation2 + $0x10] sm:$0xff]
      %v148 = vld [vmem:[#allocation2 + $0x18] sm:$0xff]
      %v149 = vld [vmem:[#allocation2 + $0x20] sm:$0xff]
      %v150 = vld [vmem:[#allocation2 + $0x28] sm:$0xff]
      %v151 = vld [vmem:[#allocation2 + $0x30] sm:$0xff]
      %v152 = vld [vmem:[#allocation2 + $0x38] sm:$0xff]
      %v153 = vld [vmem:[#allocation2 + $0x40] sm:$0xff]
      %v154 = vld [vmem:[#allocation2 + $0x48] sm:$0xff]
      %v155 = vld [vmem:[#allocation2 + $0x50] sm:$0xff]
      %v156 = vld [vmem:[#allocation2 + $0x58] sm:$0xff]
      %v157 = vld [vmem:[#allocation2 + $0x60] sm:$0xff]
      %v158 = vld [vmem:[#allocation2 + $0x68] sm:$0xff]
      %v159 = vld [vmem:[#allocation2 + $0x70] sm:$0xff]
      %v160 = vld [vmem:[#allocation2 + $0x78] sm:$0xff]
      %v177 = vunpack.c.l.b16 %v129
      %v178 = vunpack.c.l.b16 %v130
      %v179 = vunpack.c.l.b16 %v131
      %v180 = vunpack.c.l.b16 %v132
      %v181 = vunpack.c.l.b16 %v133
      %v182 = vunpack.c.l.b16 %v134
      %v183 = vunpack.c.l.b16 %v135
      %v184 = vunpack.c.l.b16 %v136
      %v185 = vunpack.c.l.b16 %v137
      %v186 = vunpack.c.l.b16 %v138
      %v187 = vunpack.c.l.b16 %v139
      %v188 = vunpack.c.l.b16 %v140
      %v189 = vunpack.c.l.b16 %v141
      %v190 = vunpack.c.l.b16 %v142
      %v191 = vunpack.c.l.b16 %v143
      %v192 = vunpack.c.l.b16 %v144
      %v193 = vpack.c.b16 %v178, %v177
      %v194 = vpack.c.b16 %v180, %v179
      %v195 = vpack.c.b16 %v182, %v181
      %v196 = vpack.c.b16 %v184, %v183
      %v197 = vpack.c.b16 %v186, %v185
      %v198 = vpack.c.b16 %v188, %v187
      %v199 = vpack.c.b16 %v190, %v189
      %v200 = vpack.c.b16 %v192, %v191
      %209 = vmatpush.bf16.msra.mxu0 %v200
      %210 = vmatpush.bf16.msra.mxu0 %v199
      %211 = vmatpush.bf16.msra.mxu0 %v198
      %212 = vmatpush.bf16.msra.mxu0 %v197
      %213 = vmatpush.bf16.msra.mxu0 %v196
      %214 = vmatpush.bf16.msra.mxu0 %v195
      %215 = vmatpush.bf16.msra.mxu0 %v194
      %216 = vmatpush.bf16.msra.mxu0 %v193
      %217 = vmatmul.bf16.gmra.mxu0 %v114
      %v218 = vpop.f32.mrf.mxu0
      %v219 = vadd.f32 0.0, %v218
      %v220 = vpop.f32.mrf.mxu0
      %v221 = vadd.f32 0.0, %v220
      %222 = vmatmul.bf16.gmra.mxu0 %v115
      %v223 = vpop.f32.mrf.mxu0
      %v224 = vadd.f32 0.0, %v223
      %v225 = vpop.f32.mrf.mxu0
      %v226 = vadd.f32 0.0, %v225
      %227 = vmatmul.bf16.gmra.mxu0 %v116
      %v228 = vpop.f32.mrf.mxu0
      %v229 = vadd.f32 0.0, %v228
      %v230 = vpop.f32.mrf.mxu0
      %v231 = vadd.f32 0.0, %v230
      %232 = vmatmul.bf16.gmra.mxu0 %v117
      %v233 = vpop.f32.mrf.mxu0
      %v234 = vadd.f32 0.0, %v233
      %v235 = vpop.f32.mrf.mxu0
      %v236 = vadd.f32 0.0, %v235
      %237 = vmatmul.bf16.gmra.mxu0 %v118
      %v238 = vpop.f32.mrf.mxu0
      %v239 = vadd.f32 0.0, %v238
      %v240 = vpop.f32.mrf.mxu0
      %v241 = vadd.f32 0.0, %v240
      %242 = vmatmul.bf16.gmra.mxu0 %v119
      %v243 = vpop.f32.mrf.mxu0
      %v244 = vadd.f32 0.0, %v243
      %v245 = vpop.f32.mrf.mxu0
      %v246 = vadd.f32 0.0, %v245
      %247 = vmatmul.bf16.gmra.mxu0 %v120
      %v248 = vpop.f32.mrf.mxu0
      %v249 = vadd.f32 0.0, %v248
      %v250 = vpop.f32.mrf.mxu0
      %v251 = vadd.f32 0.0, %v250
      %252 = vmatmul.bf16.gmra.mxu0 %v121
      %v253 = vpop.f32.mrf.mxu0
      %v254 = vadd.f32 0.0, %v253
      %v255 = vpop.f32.mrf.mxu0
      %v256 = vadd.f32 0.0, %v255
      %257 = vdwg.mxu0
      %v258 = vadd.f32 %v145, %v219
      %v259 = vadd.f32 %v146, %v221
      %v260 = vadd.f32 %v147, %v224
      %v261 = vadd.f32 %v148, %v226
      %v262 = vadd.f32 %v149, %v229
      %v263 = vadd.f32 %v150, %v231
      %v264 = vadd.f32 %v151, %v234
      %v265 = vadd.f32 %v152, %v236
      %v266 = vadd.f32 %v153, %v239
      %v267 = vadd.f32 %v154, %v241
      %v268 = vadd.f32 %v155, %v244
      %v269 = vadd.f32 %v156, %v246
      %v270 = vadd.f32 %v157, %v249
      %v271 = vadd.f32 %v158, %v251
      %v272 = vadd.f32 %v159, %v254
      %v273 = vadd.f32 %v160, %v256
      %274 = vst [vmem:[#allocation2] sm:$0xff] %v258
      %275 = vst [vmem:[#allocation2 + $0x8] sm:$0xff] %v259
      %276 = vst [vmem:[#allocation2 + $0x10] sm:$0xff] %v260
      %277 = vst [vmem:[#allocation2 + $0x18] sm:$0xff] %v261
      %278 = vst [vmem:[#allocation2 + $0x20] sm:$0xff] %v262
      %279 = vst [vmem:[#allocation2 + $0x28] sm:$0xff] %v263
      %280 = vst [vmem:[#allocation2 + $0x30] sm:$0xff] %v264
      %281 = vst [vmem:[#allocation2 + $0x38] sm:$0xff] %v265
      %282 = vst [vmem:[#allocation2 + $0x40] sm:$0xff] %v266
      %283 = vst [vmem:[#allocation2 + $0x48] sm:$0xff] %v267
      %284 = vst [vmem:[#allocation2 + $0x50] sm:$0xff] %v268
      %285 = vst [vmem:[#allocation2 + $0x58] sm:$0xff] %v269
      %286 = vst [vmem:[#allocation2 + $0x60] sm:$0xff] %v270
      %287 = vst [vmem:[#allocation2 + $0x68] sm:$0xff] %v271
      %288 = vst [vmem:[#allocation2 + $0x70] sm:$0xff] %v272
      %289 = vst [vmem:[#allocation2 + $0x78] sm:$0xff] %v273
    $region37: #{tpu_custom_call.1} parent=1 // pred_fallthru
      _
    // Predicated region
    $region38: #{tpu_custom_call.1} parent=1 // pred_check
      %p290 = pneg %p53
    $region39: #{tpu_custom_call.1} parent=1 // pred_check_branch
      %292 = sbr.rel (%p290) target = $region41
    $region40: #{tpu_custom_call.1} parent=1 // pred_region
      %s293 = smul.u32 0, 128
      %s294 = sshra.s32 %s293, 3
      %s295 = sand.u32 %s293, 7
      %s296 = smul.addr %s294, 4
      %s297 = scalar_lea.vmem %s3, %s296
      %v298 = vld [vmem:[%s297] sm:$0xf]
      %v299 = vld [vmem:[%s297 + $0x4] sm:$0xf]
      %v300 = vld [vmem:[%s297 + $0x8] sm:$0xf]
      %v301 = vld [vmem:[%s297 + $0xc] sm:$0xf]
      %v302 = vld [vmem:[%s297 + $0x10] sm:$0xf]
      %v303 = vld [vmem:[%s297 + $0x14] sm:$0xf]
      %v304 = vld [vmem:[%s297 + $0x18] sm:$0xf]
      %v305 = vld [vmem:[%s297 + $0x1c] sm:$0xf]
      %v306 = vld [vmem:[%s297 + $0x20] sm:$0xf]
      %v307 = vld [vmem:[%s297 + $0x24] sm:$0xf]
      %v308 = vld [vmem:[%s297 + $0x28] sm:$0xf]
      %v309 = vld [vmem:[%s297 + $0x2c] sm:$0xf]
      %v310 = vld [vmem:[%s297 + $0x30] sm:$0xf]
      %v311 = vld [vmem:[%s297 + $0x34] sm:$0xf]
      %v312 = vld [vmem:[%s297 + $0x38] sm:$0xf]
      %v313 = vld [vmem:[%s297 + $0x3c] sm:$0xf]
      %v314 = vld [vmem:[#allocation2] sm:$0xff]
      %v315 = vld [vmem:[#allocation2 + $0x8] sm:$0xff]
      %v316 = vld [vmem:[#allocation2 + $0x10] sm:$0xff]
      %v317 = vld [vmem:[#allocation2 + $0x18] sm:$0xff]
      %v318 = vld [vmem:[#allocation2 + $0x20] sm:$0xff]
      %v319 = vld [vmem:[#allocation2 + $0x28] sm:$0xff]
      %v320 = vld [vmem:[#allocation2 + $0x30] sm:$0xff]
      %v321 = vld [vmem:[#allocation2 + $0x38] sm:$0xff]
      %v322 = vld [vmem:[#allocation2 + $0x40] sm:$0xff]
      %v323 = vld [vmem:[#allocation2 + $0x48] sm:$0xff]
      %v324 = vld [vmem:[#allocation2 + $0x50] sm:$0xff]
      %v325 = vld [vmem:[#allocation2 + $0x58] sm:$0xff]
      %v326 = vld [vmem:[#allocation2 + $0x60] sm:$0xff]
      %v327 = vld [vmem:[#allocation2 + $0x68] sm:$0xff]
      %v328 = vld [vmem:[#allocation2 + $0x70] sm:$0xff]
      %v329 = vld [vmem:[#allocation2 + $0x78] sm:$0xff]
      %v330 = vld [vmem:[%s4] sm:$0xff]
      %v331 = vld [vmem:[%s4 + $0x8] sm:$0xff]
      %v332 = vld [vmem:[%s4 + $0x10] sm:$0xff]
      %v333 = vld [vmem:[%s4 + $0x18] sm:$0xff]
      %v334 = vld [vmem:[%s4 + $0x20] sm:$0xff]
      %v335 = vld [vmem:[%s4 + $0x28] sm:$0xff]
      %v336 = vld [vmem:[%s4 + $0x30] sm:$0xff]
      %v337 = vld [vmem:[%s4 + $0x38] sm:$0xff]
      %v338 = vld [vmem:[%s4 + $0x40] sm:$0xff]
      %v339 = vld [vmem:[%s4 + $0x48] sm:$0xff]
      %v340 = vld [vmem:[%s4 + $0x50] sm:$0xff]
      %v341 = vld [vmem:[%s4 + $0x58] sm:$0xff]
      %v342 = vld [vmem:[%s4 + $0x60] sm:$0xff]
      %v343 = vld [vmem:[%s4 + $0x68] sm:$0xff]
      %v344 = vld [vmem:[%s4 + $0x70] sm:$0xff]
      %v345 = vld [vmem:[%s4 + $0x78] sm:$0xff]
      %347 = vset.pattern.permute.xlu0 0
      %348 = vperm.xlu0 %347, %v330
      %v349 = vpop.permute.xlu0 %348
      %352 = vset.pattern.permute.xlu0 0
      %353 = vperm.xlu0 %352, %v331
      %v354 = vpop.permute.xlu0 %353
      %357 = vset.pattern.permute.xlu0 0
      %358 = vperm.xlu0 %357, %v332
      %v359 = vpop.permute.xlu0 %358
      %362 = vset.pattern.permute.xlu0 0
      %363 = vperm.xlu0 %362, %v333
      %v364 = vpop.permute.xlu0 %363
      %367 = vset.pattern.permute.xlu0 0
      %368 = vperm.xlu0 %367, %v334
      %v369 = vpop.permute.xlu0 %368
      %372 = vset.pattern.permute.xlu0 0
      %373 = vperm.xlu0 %372, %v335
      %v374 = vpop.permute.xlu0 %373
      %377 = vset.pattern.permute.xlu0 0
      %378 = vperm.xlu0 %377, %v336
      %v379 = vpop.permute.xlu0 %378
      %382 = vset.pattern.permute.xlu0 0
      %383 = vperm.xlu0 %382, %v337
      %v384 = vpop.permute.xlu0 %383
      %387 = vset.pattern.permute.xlu0 0
      %388 = vperm.xlu0 %387, %v338
      %v389 = vpop.permute.xlu0 %388
      %392 = vset.pattern.permute.xlu0 0
      %393 = vperm.xlu0 %392, %v339
      %v394 = vpop.permute.xlu0 %393
      %397 = vset.pattern.permute.xlu0 0
      %398 = vperm.xlu0 %397, %v340
      %v399 = vpop.permute.xlu0 %398
      %402 = vset.pattern.permute.xlu0 0
      %403 = vperm.xlu0 %402, %v341
      %v404 = vpop.permute.xlu0 %403
      %407 = vset.pattern.permute.xlu0 0
      %408 = vperm.xlu0 %407, %v342
      %v409 = vpop.permute.xlu0 %408
      %412 = vset.pattern.permute.xlu0 0
      %413 = vperm.xlu0 %412, %v343
      %v414 = vpop.permute.xlu0 %413
      %417 = vset.pattern.permute.xlu0 0
      %418 = vperm.xlu0 %417, %v344
      %v419 = vpop.permute.xlu0 %418
      %422 = vset.pattern.permute.xlu0 0
      %423 = vperm.xlu0 %422, %v345
      %v424 = vpop.permute.xlu0 %423
      %v426 = vmul.f32 %v314, %v349
      %v427 = vmul.f32 %v315, %v354
      %v428 = vmul.f32 %v316, %v359
      %v429 = vmul.f32 %v317, %v364
      %v430 = vmul.f32 %v318, %v369
      %v431 = vmul.f32 %v319, %v374
      %v432 = vmul.f32 %v320, %v379
      %v433 = vmul.f32 %v321, %v384
      %v434 = vmul.f32 %v322, %v389
      %v435 = vmul.f32 %v323, %v394
      %v436 = vmul.f32 %v324, %v399
      %v437 = vmul.f32 %v325, %v404
      %v438 = vmul.f32 %v326, %v409
      %v439 = vmul.f32 %v327, %v414
      %v440 = vmul.f32 %v328, %v419
      %v441 = vmul.f32 %v329, %v424
      %v442 = vpack.c.bf16 %v427, %v426
      %v443 = vpack.c.bf16 %v429, %v428
      %v444 = vpack.c.bf16 %v431, %v430
      %v445 = vpack.c.bf16 %v433, %v432
      %v446 = vpack.c.bf16 %v435, %v434
      %v447 = vpack.c.bf16 %v437, %v436
      %v448 = vpack.c.bf16 %v439, %v438
      %v449 = vpack.c.bf16 %v441, %v440
      %v450 = vld [vmem:[%s6] sm:$0xf]
      %v451 = vld [vmem:[%s6 + $0x4] sm:$0xf]
      %v452 = vld [vmem:[%s6 + $0x8] sm:$0xf]
      %v453 = vld [vmem:[%s6 + $0xc] sm:$0xf]
      %v454 = vld [vmem:[%s6 + $0x10] sm:$0xf]
      %v455 = vld [vmem:[%s6 + $0x14] sm:$0xf]
      %v456 = vld [vmem:[%s6 + $0x18] sm:$0xf]
      %v457 = vld [vmem:[%s6 + $0x1c] sm:$0xf]
      %v458 = vld [vmem:[%s6 + $0x20] sm:$0xf]
      %v459 = vld [vmem:[%s6 + $0x24] sm:$0xf]
      %v460 = vld [vmem:[%s6 + $0x28] sm:$0xf]
      %v461 = vld [vmem:[%s6 + $0x2c] sm:$0xf]
      %v462 = vld [vmem:[%s6 + $0x30] sm:$0xf]
      %v463 = vld [vmem:[%s6 + $0x34] sm:$0xf]
      %v464 = vld [vmem:[%s6 + $0x38] sm:$0xf]
      %v465 = vld [vmem:[%s6 + $0x3c] sm:$0xf]
      %v466 = vld [vmem:[%s7] sm:$0xf]
      %v467 = vld [vmem:[%s7 + $0x4] sm:$0xf]
      %v468 = vld [vmem:[%s7 + $0x8] sm:$0xf]
      %v469 = vld [vmem:[%s7 + $0xc] sm:$0xf]
      %v470 = vld [vmem:[%s7 + $0x10] sm:$0xf]
      %v471 = vld [vmem:[%s7 + $0x14] sm:$0xf]
      %v472 = vld [vmem:[%s7 + $0x18] sm:$0xf]
      %v473 = vld [vmem:[%s7 + $0x1c] sm:$0xf]
      %v474 = vld [vmem:[%s7 + $0x20] sm:$0xf]
      %v475 = vld [vmem:[%s7 + $0x24] sm:$0xf]
      %v476 = vld [vmem:[%s7 + $0x28] sm:$0xf]
      %v477 = vld [vmem:[%s7 + $0x2c] sm:$0xf]
      %v478 = vld [vmem:[%s7 + $0x30] sm:$0xf]
      %v479 = vld [vmem:[%s7 + $0x34] sm:$0xf]
      %v480 = vld [vmem:[%s7 + $0x38] sm:$0xf]
      %v481 = vld [vmem:[%s7 + $0x3c] sm:$0xf]
      %v498 = vunpack.c.l.b16 %v298
      %v499 = vunpack.c.l.b16 %v299
      %v500 = vunpack.c.l.b16 %v300
      %v501 = vunpack.c.l.b16 %v301
      %v502 = vunpack.c.l.b16 %v302
      %v503 = vunpack.c.l.b16 %v303
      %v504 = vunpack.c.l.b16 %v304
      %v505 = vunpack.c.l.b16 %v305
      %v506 = vunpack.c.l.b16 %v306
      %v507 = vunpack.c.l.b16 %v307
      %v508 = vunpack.c.l.b16 %v308
      %v509 = vunpack.c.l.b16 %v309
      %v510 = vunpack.c.l.b16 %v310
      %v511 = vunpack.c.l.b16 %v311
      %v512 = vunpack.c.l.b16 %v312
      %v513 = vunpack.c.l.b16 %v313
      %v514 = vpack.c.b16 %v499, %v498
      %v515 = vpack.c.b16 %v501, %v500
      %v516 = vpack.c.b16 %v503, %v502
      %v517 = vpack.c.b16 %v505, %v504
      %v518 = vpack.c.b16 %v507, %v506
      %v519 = vpack.c.b16 %v509, %v508
      %v520 = vpack.c.b16 %v511, %v510
      %v521 = vpack.c.b16 %v513, %v512
      %v546 = vunpack.c.l.b16 %v466
      %v547 = vunpack.c.l.b16 %v467
      %v548 = vunpack.c.l.b16 %v468
      %v549 = vunpack.c.l.b16 %v469
      %v550 = vunpack.c.l.b16 %v470
      %v551 = vunpack.c.l.b16 %v471
      %v552 = vunpack.c.l.b16 %v472
      %v553 = vunpack.c.l.b16 %v473
      %v554 = vunpack.c.l.b16 %v474
      %v555 = vunpack.c.l.b16 %v475
      %v556 = vunpack.c.l.b16 %v476
      %v557 = vunpack.c.l.b16 %v477
      %v558 = vunpack.c.l.b16 %v478
      %v559 = vunpack.c.l.b16 %v479
      %v560 = vunpack.c.l.b16 %v480
      %v561 = vunpack.c.l.b16 %v481
      %v562 = vpack.c.b16 %v547, %v546
      %v563 = vpack.c.b16 %v549, %v548
      %v564 = vpack.c.b16 %v551, %v550
      %v565 = vpack.c.b16 %v553, %v552
      %v566 = vpack.c.b16 %v555, %v554
      %v567 = vpack.c.b16 %v557, %v556
      %v568 = vpack.c.b16 %v559, %v558
      %v569 = vpack.c.b16 %v561, %v560
      %578 = vmatpush.bf16.msra.mxu0 %v569
      %579 = vmatpush.bf16.msra.mxu0 %v568
      %580 = vmatpush.bf16.msra.mxu0 %v567
      %581 = vmatpush.bf16.msra.mxu0 %v566
      %582 = vmatpush.bf16.msra.mxu0 %v565
      %583 = vmatpush.bf16.msra.mxu0 %v564
      %584 = vmatpush.bf16.msra.mxu0 %v563
      %585 = vmatpush.bf16.msra.mxu0 %v562
      %586 = vmatmul.bf16.gmra.mxu0 %v514
      %v587 = vpop.f32.mrf.mxu0
      %v588 = vadd.f32 0.0, %v587
      %v589 = vpop.f32.mrf.mxu0
      %v590 = vadd.f32 0.0, %v589
      %591 = vmatmul.bf16.gmra.mxu0 %v515
      %v592 = vpop.f32.mrf.mxu0
      %v593 = vadd.f32 0.0, %v592
      %v594 = vpop.f32.mrf.mxu0
      %v595 = vadd.f32 0.0, %v594
      %596 = vmatmul.bf16.gmra.mxu0 %v516
      %v597 = vpop.f32.mrf.mxu0
      %v598 = vadd.f32 0.0, %v597
      %v599 = vpop.f32.mrf.mxu0
      %v600 = vadd.f32 0.0, %v599
      %601 = vmatmul.bf16.gmra.mxu0 %v517
      %v602 = vpop.f32.mrf.mxu0
      %v603 = vadd.f32 0.0, %v602
      %v604 = vpop.f32.mrf.mxu0
      %v605 = vadd.f32 0.0, %v604
      %606 = vmatmul.bf16.gmra.mxu0 %v518
      %v607 = vpop.f32.mrf.mxu0
      %v608 = vadd.f32 0.0, %v607
      %v609 = vpop.f32.mrf.mxu0
      %v610 = vadd.f32 0.0, %v609
      %611 = vmatmul.bf16.gmra.mxu0 %v519
      %v612 = vpop.f32.mrf.mxu0
      %v613 = vadd.f32 0.0, %v612
      %v614 = vpop.f32.mrf.mxu0
      %v615 = vadd.f32 0.0, %v614
      %616 = vmatmul.bf16.gmra.mxu0 %v520
      %v617 = vpop.f32.mrf.mxu0
      %v618 = vadd.f32 0.0, %v617
      %v619 = vpop.f32.mrf.mxu0
      %v620 = vadd.f32 0.0, %v619
      %621 = vmatmul.bf16.gmra.mxu0 %v521
      %v622 = vpop.f32.mrf.mxu0
      %v623 = vadd.f32 0.0, %v622
      %v624 = vpop.f32.mrf.mxu0
      %v625 = vadd.f32 0.0, %v624
      %626 = vdwg.mxu0
      %v643 = vunpack.c.l.b16 %v450
      %v644 = vunpack.c.l.b16 %v451
      %v645 = vunpack.c.l.b16 %v452
      %v646 = vunpack.c.l.b16 %v453
      %v647 = vunpack.c.l.b16 %v454
      %v648 = vunpack.c.l.b16 %v455
      %v649 = vunpack.c.l.b16 %v456
      %v650 = vunpack.c.l.b16 %v457
      %v651 = vunpack.c.l.b16 %v458
      %v652 = vunpack.c.l.b16 %v459
      %v653 = vunpack.c.l.b16 %v460
      %v654 = vunpack.c.l.b16 %v461
      %v655 = vunpack.c.l.b16 %v462
      %v656 = vunpack.c.l.b16 %v463
      %v657 = vunpack.c.l.b16 %v464
      %v658 = vunpack.c.l.b16 %v465
      %v659 = vpack.c.b16 %v644, %v643
      %v660 = vpack.c.b16 %v646, %v645
      %v661 = vpack.c.b16 %v648, %v647
      %v662 = vpack.c.b16 %v650, %v649
      %v663 = vpack.c.b16 %v652, %v651
      %v664 = vpack.c.b16 %v654, %v653
      %v665 = vpack.c.b16 %v656, %v655
      %v666 = vpack.c.b16 %v658, %v657
      %675 = vmatpush.bf16.msra.mxu0 %v666
      %676 = vmatpush.bf16.msra.mxu0 %v665
      %677 = vmatpush.bf16.msra.mxu0 %v664
      %678 = vmatpush.bf16.msra.mxu0 %v663
      %679 = vmatpush.bf16.msra.mxu0 %v662
      %680 = vmatpush.bf16.msra.mxu0 %v661
      %681 = vmatpush.bf16.msra.mxu0 %v660
      %682 = vmatpush.bf16.msra.mxu0 %v659
      %683 = vmatmul.bf16.gmra.mxu0 %v442
      %v684 = vpop.f32.mrf.mxu0
      %v685 = vadd.f32 %v588, %v684
      %v686 = vpop.f32.mrf.mxu0
      %v687 = vadd.f32 %v590, %v686
      %688 = vmatmul.bf16.gmra.mxu0 %v443
      %v689 = vpop.f32.mrf.mxu0
      %v690 = vadd.f32 %v593, %v689
      %v691 = vpop.f32.mrf.mxu0
      %v692 = vadd.f32 %v595, %v691
      %693 = vmatmul.bf16.gmra.mxu0 %v444
      %v694 = vpop.f32.mrf.mxu0
      %v695 = vadd.f32 %v598, %v694
      %v696 = vpop.f32.mrf.mxu0
      %v697 = vadd.f32 %v600, %v696
      %698 = vmatmul.bf16.gmra.mxu0 %v445
      %v699 = vpop.f32.mrf.mxu0
      %v700 = vadd.f32 %v603, %v699
      %v701 = vpop.f32.mrf.mxu0
      %v702 = vadd.f32 %v605, %v701
      %703 = vmatmul.bf16.gmra.mxu0 %v446
      %v704 = vpop.f32.mrf.mxu0
      %v705 = vadd.f32 %v608, %v704
      %v706 = vpop.f32.mrf.mxu0
      %v707 = vadd.f32 %v610, %v706
      %708 = vmatmul.bf16.gmra.mxu0 %v447
      %v709 = vpop.f32.mrf.mxu0
      %v710 = vadd.f32 %v613, %v709
      %v711 = vpop.f32.mrf.mxu0
      %v712 = vadd.f32 %v615, %v711
      %713 = vmatmul.bf16.gmra.mxu0 %v448
      %v714 = vpop.f32.mrf.mxu0
      %v715 = vadd.f32 %v618, %v714
      %v716 = vpop.f32.mrf.mxu0
      %v717 = vadd.f32 %v620, %v716
      %718 = vmatmul.bf16.gmra.mxu0 %v449
      %v719 = vpop.f32.mrf.mxu0
      %v720 = vadd.f32 %v623, %v719
      %v721 = vpop.f32.mrf.mxu0
      %v722 = vadd.f32 %v625, %v721
      %723 = vdwg.mxu0
      %v724 = vld [vmem:[%s8] sm:$0x1]
      %v726 = vperm.slane %v724, 0
      %v728 = vadd.f32 %v685, %v726
      %v729 = vadd.f32 %v687, %v726
      %v730 = vadd.f32 %v690, %v726
      %v731 = vadd.f32 %v692, %v726
      %v732 = vadd.f32 %v695, %v726
      %v733 = vadd.f32 %v697, %v726
      %v734 = vadd.f32 %v700, %v726
      %v735 = vadd.f32 %v702, %v726
      %v736 = vadd.f32 %v705, %v726
      %v737 = vadd.f32 %v707, %v726
      %v738 = vadd.f32 %v710, %v726
      %v739 = vadd.f32 %v712, %v726
      %v740 = vadd.f32 %v715, %v726
      %v741 = vadd.f32 %v717, %v726
      %v742 = vadd.f32 %v720, %v726
      %v743 = vadd.f32 %v722, %v726
      %v744 = vmax.f32 %v728, 0.0
      %v745 = vmax.f32 %v729, 0.0
      %v746 = vmax.f32 %v730, 0.0
      %v747 = vmax.f32 %v731, 0.0
      %v748 = vmax.f32 %v732, 0.0
      %v749 = vmax.f32 %v733, 0.0
      %v750 = vmax.f32 %v734, 0.0
      %v751 = vmax.f32 %v735, 0.0
      %v752 = vmax.f32 %v736, 0.0
      %v753 = vmax.f32 %v737, 0.0
      %v754 = vmax.f32 %v738, 0.0
      %v755 = vmax.f32 %v739, 0.0
      %v756 = vmax.f32 %v740, 0.0
      %v757 = vmax.f32 %v741, 0.0
      %v758 = vmax.f32 %v742, 0.0
      %v759 = vmax.f32 %v743, 0.0
      %v760 = vld [vmem:[%s5] sm:$0xff]
      %v761 = vld [vmem:[%s5 + $0x8] sm:$0xff]
      %v762 = vld [vmem:[%s5 + $0x10] sm:$0xff]
      %v763 = vld [vmem:[%s5 + $0x18] sm:$0xff]
      %v764 = vld [vmem:[%s5 + $0x20] sm:$0xff]
      %v765 = vld [vmem:[%s5 + $0x28] sm:$0xff]
      %v766 = vld [vmem:[%s5 + $0x30] sm:$0xff]
      %v767 = vld [vmem:[%s5 + $0x38] sm:$0xff]
      %v768 = vld [vmem:[%s5 + $0x40] sm:$0xff]
      %v769 = vld [vmem:[%s5 + $0x48] sm:$0xff]
      %v770 = vld [vmem:[%s5 + $0x50] sm:$0xff]
      %v771 = vld [vmem:[%s5 + $0x58] sm:$0xff]
      %v772 = vld [vmem:[%s5 + $0x60] sm:$0xff]
      %v773 = vld [vmem:[%s5 + $0x68] sm:$0xff]
      %v774 = vld [vmem:[%s5 + $0x70] sm:$0xff]
      %v775 = vld [vmem:[%s5 + $0x78] sm:$0xff]
      %777 = vset.pattern.permute.xlu0 0
      %778 = vperm.xlu0 %777, %v760
      %v779 = vpop.permute.xlu0 %778
      %782 = vset.pattern.permute.xlu0 0
      %783 = vperm.xlu0 %782, %v761
      %v784 = vpop.permute.xlu0 %783
      %787 = vset.pattern.permute.xlu0 0
      %788 = vperm.xlu0 %787, %v762
      %v789 = vpop.permute.xlu0 %788
      %792 = vset.pattern.permute.xlu0 0
      %793 = vperm.xlu0 %792, %v763
      %v794 = vpop.permute.xlu0 %793
      %797 = vset.pattern.permute.xlu0 0
      %798 = vperm.xlu0 %797, %v764
      %v799 = vpop.permute.xlu0 %798
      %802 = vset.pattern.permute.xlu0 0
      %803 = vperm.xlu0 %802, %v765
      %v804 = vpop.permute.xlu0 %803
      %807 = vset.pattern.permute.xlu0 0
      %808 = vperm.xlu0 %807, %v766
      %v809 = vpop.permute.xlu0 %808
      %812 = vset.pattern.permute.xlu0 0
      %813 = vperm.xlu0 %812, %v767
      %v814 = vpop.permute.xlu0 %813
      %817 = vset.pattern.permute.xlu0 0
      %818 = vperm.xlu0 %817, %v768
      %v819 = vpop.permute.xlu0 %818
      %822 = vset.pattern.permute.xlu0 0
      %823 = vperm.xlu0 %822, %v769
      %v824 = vpop.permute.xlu0 %823
      %827 = vset.pattern.permute.xlu0 0
      %828 = vperm.xlu0 %827, %v770
      %v829 = vpop.permute.xlu0 %828
      %832 = vset.pattern.permute.xlu0 0
      %833 = vperm.xlu0 %832, %v771
      %v834 = vpop.permute.xlu0 %833
      %837 = vset.pattern.permute.xlu0 0
      %838 = vperm.xlu0 %837, %v772
      %v839 = vpop.permute.xlu0 %838
      %842 = vset.pattern.permute.xlu0 0
      %843 = vperm.xlu0 %842, %v773
      %v844 = vpop.permute.xlu0 %843
      %847 = vset.pattern.permute.xlu0 0
      %848 = vperm.xlu0 %847, %v774
      %v849 = vpop.permute.xlu0 %848
      %852 = vset.pattern.permute.xlu0 0
      %853 = vperm.xlu0 %852, %v775
      %v854 = vpop.permute.xlu0 %853
      %v856 = vmul.f32 %v744, %v779
      %v857 = vmul.f32 %v745, %v784
      %v858 = vmul.f32 %v746, %v789
      %v859 = vmul.f32 %v747, %v794
      %v860 = vmul.f32 %v748, %v799
      %v861 = vmul.f32 %v749, %v804
      %v862 = vmul.f32 %v750, %v809
      %v863 = vmul.f32 %v751, %v814
      %v864 = vmul.f32 %v752, %v819
      %v865 = vmul.f32 %v753, %v824
      %v866 = vmul.f32 %v754, %v829
      %v867 = vmul.f32 %v755, %v834
      %v868 = vmul.f32 %v756, %v839
      %v869 = vmul.f32 %v757, %v844
      %v870 = vmul.f32 %v758, %v849
      %v871 = vmul.f32 %v759, %v854
      %v872 = vpack.c.bf16 %v856, %v856
      %v873 = vpack.c.bf16 %v857, %v857
      %v874 = vpack.c.bf16 %v858, %v858
      %v875 = vpack.c.bf16 %v859, %v859
      %v876 = vpack.c.bf16 %v860, %v860
      %v877 = vpack.c.bf16 %v861, %v861
      %v878 = vpack.c.bf16 %v862, %v862
      %v879 = vpack.c.bf16 %v863, %v863
      %v880 = vpack.c.bf16 %v864, %v864
      %v881 = vpack.c.bf16 %v865, %v865
      %v882 = vpack.c.bf16 %v866, %v866
      %v883 = vpack.c.bf16 %v867, %v867
      %v884 = vpack.c.bf16 %v868, %v868
      %v885 = vpack.c.bf16 %v869, %v869
      %v886 = vpack.c.bf16 %v870, %v870
      %v887 = vpack.c.bf16 %v871, %v871
      %888 = vst [vmem:[#allocation6] sm:$0xf] %v872
      %889 = vst [vmem:[#allocation6 + $0x4] sm:$0xf] %v873
      %890 = vst [vmem:[#allocation6 + $0x8] sm:$0xf] %v874
      %891 = vst [vmem:[#allocation6 + $0xc] sm:$0xf] %v875
      %892 = vst [vmem:[#allocation6 + $0x10] sm:$0xf] %v876
      %893 = vst [vmem:[#allocation6 + $0x14] sm:$0xf] %v877
      %894 = vst [vmem:[#allocation6 + $0x18] sm:$0xf] %v878
      %895 = vst [vmem:[#allocation6 + $0x1c] sm:$0xf] %v879
      %896 = vst [vmem:[#allocation6 + $0x20] sm:$0xf] %v880
      %897 = vst [vmem:[#allocation6 + $0x24] sm:$0xf] %v881
      %898 = vst [vmem:[#allocation6 + $0x28] sm:$0xf] %v882
      %899 = vst [vmem:[#allocation6 + $0x2c] sm:$0xf] %v883
      %900 = vst [vmem:[#allocation6 + $0x30] sm:$0xf] %v884
      %901 = vst [vmem:[#allocation6 + $0x34] sm:$0xf] %v885
      %902 = vst [vmem:[#allocation6 + $0x38] sm:$0xf] %v886
      %903 = vst [vmem:[#allocation6 + $0x3c] sm:$0xf] %v887
    $region41: #{tpu_custom_call.1} parent=1 // pred_fallthru
      _
    // Predicated region
    $region42: #{tpu_custom_call.1} parent=1 // pred_check
      _
    $region43: #{tpu_custom_call.1} parent=1 // pred_check_branch
      %905 = sbr.rel (0) target = $region45
    $region44: #{tpu_custom_call.1} parent=1 // pred_region
      %907 = vsyncadd [#allocation7], 0
      %s908 = sshll.u32 [#allocation6], 4
      %s909 = int_to_ptr.vmem [resolvable:$true] %s908
      %s910 = sshll.u32 %s9, 4
      %s911 = int_to_ptr.hbm [resolvable:$true] %s910
      %916 = dma.vmem_to_hbm [thread:$0]  %s909, 1024, %s911, [#allocation7], 64, 64, 4
    $region45: #{tpu_custom_call.1} parent=1 // pred_fallthru
      _
    // Predicated region
    $region46: #{tpu_custom_call.1} parent=1 // pred_check
      _
    $region47: #{tpu_custom_call.1} parent=1 // pred_check_branch
      %918 = sbr.rel (0) target = $region49
    $region48: #{tpu_custom_call.1} parent=1 // pred_region
      %920 = dma.done [#allocation7], 1024
    $region49: #{tpu_custom_call.1} parent=1 // pred_fallthru
      _
    %921 = vsyncpa [#allocation7], 1

</llo_original>
